<compile_context>
chip_gen: v6e
topology: v6e:2x2x1
jax: 0.10.0
libtpu: 0.0.40
codegen_flags: <defaults>
</compile_context>

<pallas_src>
import functools

import jax
import jax.numpy as jnp
from jax.experimental import pallas as pl
from jax.experimental.pallas import tpu as pltpu


def _round_up(x, m):
    return (x + m - 1) // m * m


def policy_kernel(x_ref, w1_ref, w2_ref, out_ref):
    # x_ref: [TB, In] (bf16)  w1_ref: [In, H] (bf16)  w2_ref: [H, O] (bf16)
    # out_ref: [TB, O] (f32)
    x = x_ref[...]

    # linear1 (no bias), f32 accumulation on the MXU
    h = jnp.dot(x, w1_ref[...], preferred_element_type=jnp.float32)

    # dropout(p=0.3) -> identity in eval mode
    # TODO(synk): training-mode dropout would need pltpu.prng_seed/prng_random_bits masking.

    # relu (f32) + linear2 (no bias), bf16 feeds / f32 accumulation
    h = jnp.maximum(h, 0.0)
    logits = jnp.dot(h.astype(w2_ref.dtype), w2_ref[...],
                     preferred_element_type=jnp.float32)

    # numerically-stable softmax over the last (real, unpadded) dim, then + 1e-8
    m = jnp.max(logits, axis=-1, keepdims=True)
    e = jnp.exp(logits - m)
    denom = jnp.sum(e, axis=-1, keepdims=True)
    p = e * pl.reciprocal(denom, approx=True)
    out_ref[...] = p + jnp.float32(1e-8)


def prepare_policy_params(w1, w2, dtype=jnp.bfloat16):
    """One-time parameter prep (hoisted out of the per-call path).

    w1: [hidden, in]  (PyTorch linear1.weight layout)
    w2: [out, hidden] (PyTorch linear2.weight layout)
    Returns (w1_t [In, H], w2_t [H, O]) cast to `dtype` for the MXU.
    """
    hidden, _in = w1.shape
    out, hidden2 = w2.shape
    assert hidden == hidden2
    w1_t = jnp.asarray(w1).astype(dtype).T   # [In, H]
    w2_t = jnp.asarray(w2).astype(dtype).T   # [H, O]  (no lane padding)
    return w1_t, w2_t


# Batch tile for the gridded (large-batch) path.  At these feature sizes a
# 2048-row tile is ~0.5 MB (x, bf16) + ~1 MB (out, f32) per buffer -> far
# under the default scoped-VMEM limit on v5e/v6e/v7x, and per-step overhead
# (~0.35 us) is well amortized.
_MAX_TILE_B = 2048


@functools.partial(jax.jit, static_argnames=("training",))
def policy_network_forward(x, w1_t, w2_t, training=False):
    """x: [B, In];  w1_t: [In, H];  w2_t: [H, O] (from prepare_policy_params)."""
    if training:
        # TODO(synk): implement training-mode dropout (p=0.3) before using for training.
        raise NotImplementedError("PolicyNetwork Pallas kernel is eval-mode only")

    B, In = x.shape
    H, O = w2_t.shape

    # Feed the MXU bf16 (halves HBM read bytes on the x-bound large-batch path).
    x = x.astype(w1_t.dtype)

    if B <= _MAX_TILE_B:
        # Single full-extent block: no batch padding, no output slice.
        tile_b = B
        b_pad = B
    else:
        # Gridded path: >= 2 "parallel" steps (keeps both v7x TCs busy).
        tile_b = _MAX_TILE_B
        b_pad = _round_up(B, tile_b)
        if b_pad != B:
            x = jnp.pad(x, ((0, b_pad - B), (0, 0)))

    out = pl.pallas_call(
        policy_kernel,
        out_shape=jax.ShapeDtypeStruct((b_pad, O), jnp.float32),
        grid_spec=pl.GridSpec(
            grid=(b_pad // tile_b,),
            in_specs=[
                pl.BlockSpec((tile_b, In), lambda i: (i, 0)),  # batch tile
                pl.BlockSpec((In, H), lambda i: (0, 0)),       # resident weight
                pl.BlockSpec((H, O), lambda i: (0, 0)),        # resident weight
            ],
            out_specs=pl.BlockSpec((tile_b, O), lambda i: (i, 0)),  # compact output
        ),
        compiler_params=pltpu.CompilerParams(
            dimension_semantics=("parallel",)),
    )(x, w1_t, w2_t)

    if b_pad != B:
        out = out[:B]
    # p.ravel() as in the PyTorch module (contiguous reshape -> free)
    return out.reshape(-1)


def _xavier_uniform(key, shape):
    fan_out, fan_in = shape
    bound = jnp.sqrt(6.0 / (fan_in + fan_out))
    return jax.random.uniform(key, shape, jnp.float32, -bound, bound)


def _kaiming_uniform_linear(key, shape):
    # PyTorch default nn.Linear init: U(-1/sqrt(fan_in), 1/sqrt(fan_in))
    fan_in = shape[1]
    bound = 1.0 / jnp.sqrt(fan_in)
    return jax.random.uniform(key, shape, jnp.float32, -bound, bound)


def _reference(x, w1, w2):
    # Full-f32 reference of the PyTorch module (eval mode).
    h = jnp.maximum(x @ w1.T, 0.0)
    return (jax.nn.softmax(h @ w2.T, axis=-1) + 1e-8).ravel()


if __name__ == "__main__":
    input_size, hidden_size, output_size = 16, 32, 8
    batch = 2

    key = jax.random.PRNGKey(0)
    k_x, k_w1, k_w2 = jax.random.split(key, 3)

    x = jax.random.normal(k_x, (batch, input_size), jnp.float32)
    w1 = _xavier_uniform(k_w1, (hidden_size, input_size))           # linear1.weight
    w2 = _kaiming_uniform_linear(k_w2, (output_size, hidden_size))  # linear2.weight

    # One-time param prep (transpose + bf16 cast) — NOT in the per-call path.
    w1_t, w2_t = prepare_policy_params(w1, w2)

    out = policy_network_forward(x, w1_t, w2_t)
    jax.block_until_ready(out)

    ref = _reference(x, w1, w2)
    assert out.shape == (batch * output_size,)
    # Tolerance accounts for bf16 matmul inputs + approx reciprocal (probs in [0,1]).
    assert jnp.allclose(out, ref, atol=1e-2, rtol=1e-2), "small-batch mismatch"

    # Exercise the gridded / pipelined / padded path (>= 2 parallel grid steps).
    big_b = 4100  # -> b_pad=6144, three 2048-row tiles, tail padding sliced off
    xb = jax.random.normal(jax.random.PRNGKey(1), (big_b, input_size), jnp.float32)
    out_b = policy_network_forward(xb, w1_t, w2_t)
    jax.block_until_ready(out_b)
    assert out_b.shape == (big_b * output_size,)
    assert jnp.allclose(out_b, _reference(xb, w1, w2), atol=1e-2, rtol=1e-2), \
        "batched mismatch"

    print("KERNEL_OK")
</pallas_src>

<mosaic_0001>
module attributes {stable_mosaic.version = 11 : i64} {
  func.func @policy_kernel(%arg0: i32, %arg1: memref<2x16xbf16, #tpu.memory_space<vmem>>, %arg2: memref<16x32xbf16, #tpu.memory_space<vmem>>, %arg3: memref<32x8xbf16, #tpu.memory_space<vmem>>, %arg4: memref<2x8xf32, #tpu.memory_space<vmem>>) attributes {dimension_semantics = [#tpu.dimension_semantics<parallel>], iteration_bounds = array<i64: 1>, scalar_prefetch = 0 : i64, scratch_operands = 0 : i64, tpu.core_type = #tpu.core_type<tc>, window_params = [{transform_indices = @transform_0, window_bounds = array<i64: 2, 16>}, {pipeline_mode = #tpu.pipeline_mode<synchronous>, transform_indices = @transform_1, window_bounds = array<i64: 16, 32>}, {pipeline_mode = #tpu.pipeline_mode<synchronous>, transform_indices = @transform_2, window_bounds = array<i64: 32, 8>}, {transform_indices = @transform_3, window_bounds = array<i64: 2, 8>}]} {
    %c0 = arith.constant 0 : index
    %c0_0 = arith.constant 0 : index
    %0 = vector.load %arg1[%c0, %c0_0] : memref<2x16xbf16, #tpu.memory_space<vmem>>, vector<2x16xbf16>
    %c0_1 = arith.constant 0 : index
    %c0_2 = arith.constant 0 : index
    %1 = vector.load %arg2[%c0_1, %c0_2] : memref<16x32xbf16, #tpu.memory_space<vmem>>, vector<16x32xbf16>
    %cst = arith.constant dense<0.000000e+00> : vector<2x32xf32>
    %2 = tpu.matmul %0, %1, %cst {dimension_numbers = #tpu.dot_dimension_numbers<[1], [0], [0], [1], [0, 0, 1, 1], [], []>} : vector<2x16xbf16>, vector<16x32xbf16>, vector<2x32xf32> -> vector<2x32xf32>
    %cst_3 = arith.constant 0.000000e+00 : f32
    %3 = vector.broadcast %cst_3 : f32 to vector<2x32xf32>
    %4 = arith.maximumf %2, %3 : vector<2x32xf32>
    %5 = arith.truncf %4 : vector<2x32xf32> to vector<2x32xbf16>
    %c0_4 = arith.constant 0 : index
    %c0_5 = arith.constant 0 : index
    %6 = vector.load %arg3[%c0_4, %c0_5] : memref<32x8xbf16, #tpu.memory_space<vmem>>, vector<32x8xbf16>
    %cst_6 = arith.constant dense<0.000000e+00> : vector<2x8xf32>
    %7 = tpu.matmul %5, %6, %cst_6 {dimension_numbers = #tpu.dot_dimension_numbers<[1], [0], [0], [1], [0, 0, 1, 1], [], []>} : vector<2x32xbf16>, vector<32x8xbf16>, vector<2x8xf32> -> vector<2x8xf32>
    %cst_7 = arith.constant dense<0xFF800000> : vector<2xf32>
    %8 = vector.multi_reduction <maximumf>, %7, %cst_7 [1] : vector<2x8xf32> to vector<2xf32>
    %9 = vector.shape_cast %8 : vector<2xf32> to vector<2x1xf32>
    %10 = vector.broadcast %9 : vector<2x1xf32> to vector<2x8xf32>
    %11 = arith.subf %7, %10 : vector<2x8xf32>
    %12 = math.exp %11 : vector<2x8xf32>
    %cst_8 = arith.constant dense<0.000000e+00> : vector<2xf32>
    %13 = vector.multi_reduction <add>, %12, %cst_8 [1] : vector<2x8xf32> to vector<2xf32>
    %14 = vector.shape_cast %13 : vector<2xf32> to vector<2x1xf32>
    %15 = tpu.reciprocal %14 {approx = true} : vector<2x1xf32> -> vector<2x1xf32>
    %16 = vector.broadcast %15 : vector<2x1xf32> to vector<2x8xf32>
    %17 = arith.mulf %12, %16 : vector<2x8xf32>
    %cst_9 = arith.constant 9.99999993E-9 : f32
    %18 = vector.broadcast %cst_9 : f32 to vector<2x8xf32>
    %19 = arith.addf %17, %18 : vector<2x8xf32>
    %c0_10 = arith.constant 0 : index
    %c0_11 = arith.constant 0 : index
    %20 = vector.load %arg4[%c0_10, %c0_11] : memref<2x8xf32, #tpu.memory_space<vmem>>, vector<2x8xf32>
    tpu.vector_store %arg4[%c0_10, %c0_11], %19 {strides = array<i32>} : memref<2x8xf32, #tpu.memory_space<vmem>>, vector<2x8xf32>,
    return
  }
  func.func @transform_0(%arg0: i32) -> (i32, i32) {
    %c0_i32 = arith.constant 0 : i32
    %c0_i32_0 = arith.constant 0 : i32
    return %arg0, %c0_i32 : i32, i32
  }
  func.func @transform_1(%arg0: i32) -> (i32, i32) {
    %c0_i32 = arith.constant 0 : i32
    %c0_i32_0 = arith.constant 0 : i32
    %c0_i32_1 = arith.constant 0 : i32
    return %c0_i32, %c0_i32_0 : i32, i32
  }
  func.func @transform_2(%arg0: i32) -> (i32, i32) {
    %c0_i32 = arith.constant 0 : i32
    %c0_i32_0 = arith.constant 0 : i32
    %c0_i32_1 = arith.constant 0 : i32
    return %c0_i32, %c0_i32_0 : i32, i32
  }
  func.func @transform_3(%arg0: i32) -> (i32, i32) {
    %c0_i32 = arith.constant 0 : i32
    %c0_i32_0 = arith.constant 0 : i32
    return %arg0, %c0_i32 : i32, i32
  }
}

</mosaic_0001>

<llo_original>
// kernel: policy_network_forward.1
$region0: #{policy_network_forward.1}
  #allocation0 [shape = 'u32[]', space=smem, size = 0x4, offset = 0x4, fixed_abs, tag = 'smem constant byte address 0x4 - core index']
  #allocation1 [shape = 'u32[144,128]{1,0:T(1,128)}', space=vmem, size = 0x12000, scoped, tag = 'internal scratch']
  %s0 = inlined_call_operand.vmem [shape: bf16[2,16], index: 0, kind: input, shape index: {}]
  %s1 = inlined_call_operand.vmem [shape: bf16[16,32], index: 1, kind: input, shape index: {}]
  %s2 = inlined_call_operand.vmem [shape: bf16[32,8], index: 2, kind: input, shape index: {}]
  %s3 = inlined_call_operand.vmem [shape: f32[2,8], index: 3, kind: output, shape index: {}]
  %s4 = sld [smem:[#allocation0]]
  $region22: #{policy_network_forward.1} parent=0
    _
  %s6 = ssub.s32 1, %s4
  %s7 = scalar_select 0, %s6, %s4
  // Predicated region
  $region2: #{policy_network_forward.1} parent=0 // pred_check
    _
  $region3: #{policy_network_forward.1} parent=0 // pred_check_branch
    %9 = sbr.rel (0) target = $region5
  $region4: #{policy_network_forward.1} parent=0 // pred_region
    _
  $region5: #{policy_network_forward.1} parent=0 // pred_fallthru
    _
  // Predicated region
  $region6: #{policy_network_forward.1} parent=0 // pred_check
    _
  $region7: #{policy_network_forward.1} parent=0 // pred_check_branch
    %11 = sbr.rel (0) target = $region9
  $region8: #{policy_network_forward.1} parent=0 // pred_region
    _
  $region9: #{policy_network_forward.1} parent=0 // pred_fallthru
    _
  // Predicated region
  $region10: #{policy_network_forward.1} parent=0 // pred_check
    _
  $region11: #{policy_network_forward.1} parent=0 // pred_check_branch
    %13 = sbr.rel (0) target = $region13
  $region12: #{policy_network_forward.1} parent=0 // pred_region
    _
  $region13: #{policy_network_forward.1} parent=0 // pred_fallthru
    _
  %v15 = vld [vmem:[%s0] sm:$0x1]
  %v16 = vld [vmem:[%s1] sm:$0xf]
  %v17 = vld [vmem:[%s1 + $0x4] sm:$0xf]
  %v20 = vunpack.c.l.b16 %v16
  %v21 = vunpack.c.l.b16 %v17
  %v22 = vpack.c.b16 %v21, %v20
  %vm24 = vcmask 130048
  %v26 = vsel %vm24, %v15, 0
  %28 = vmatprep.subr.bf16.mxu0 0
  %29 = vmatpush1.bf16.msra.mxu0 0
  %30 = vmatprep.subr.bf16.mxu0 0
  %31 = vmatpush1.bf16.msra.mxu0 0
  %32 = vmatprep.subr.bf16.mxu0 0
  %33 = vmatpush1.bf16.msra.mxu0 0
  %34 = vmatprep.subr.bf16.mxu0 0
  %35 = vmatpush1.bf16.msra.mxu0 0
  %36 = vmatprep.subr.bf16.mxu0 0
  %37 = vmatpush1.bf16.msra.mxu0 0
  %38 = vmatprep.subr.bf16.mxu0 0
  %39 = vmatpush1.bf16.msra.mxu0 0
  %40 = vmatprep.subr.bf16.mxu0 0
  %41 = vmatpush1.bf16.msra.mxu0 0
  %42 = vmatprep.subr.bf16.mxu0 0
  %43 = vmatpush1.bf16.msra.mxu0 %v22
  %44 = vmatprep.subr.bf16.mxu0 0
  %45 = vmatpush2.bf16.msra.mxu0 0
  %46 = vmatprep.subr.bf16.mxu0 0
  %47 = vmatpush2.bf16.msra.mxu0 0
  %48 = vmatprep.subr.bf16.mxu0 0
  %49 = vmatpush2.bf16.msra.mxu0 0
  %50 = vmatprep.subr.bf16.mxu0 0
  %51 = vmatpush2.bf16.msra.mxu0 0
  %52 = vmatprep.subr.bf16.mxu0 0
  %53 = vmatpush2.bf16.msra.mxu0 0
  %54 = vmatprep.subr.bf16.mxu0 0
  %55 = vmatpush2.bf16.msra.mxu0 0
  %56 = vmatprep.subr.bf16.mxu0 0
  %57 = vmatpush2.bf16.msra.mxu0 0
  %58 = vmatprep.subr.bf16.mxu0 0
  %59 = vmatpush2.bf16.msra.mxu0 0
  %60 = vmatprep.mubr.bf16.mxu0 0
  %61 = vmatmul.mubr.bf16.gmra.mxu0 %v26
  %v62 = vpop.f32.mrf.mxu0
  %v63 = vadd.f32 0.0, %v62
  %v64 = vpop.f32.mrf.mxu0
  %v65 = vpop.f32.mrf.mxu0
  %v66 = vpop.f32.mrf.mxu0
  %67 = vdwg.mxu0
  %v68 = vmax.f32 %v63, 0.0
  %v69 = vpack.c.bf16 %v68, %v68
  %v70 = vld [vmem:[%s2] sm:$0xf]
  %v71 = vld [vmem:[%s2 + $0x4] sm:$0xf]
  %v72 = vld [vmem:[%s2 + $0x8] sm:$0xf]
  %v73 = vld [vmem:[%s2 + $0xc] sm:$0xf]
  %v78 = vunpack.c.l.b16 %v70
  %v79 = vunpack.c.l.b16 %v71
  %v80 = vunpack.c.l.b16 %v72
  %v81 = vunpack.c.l.b16 %v73
  %v82 = vpack.c.b16 %v79, %v78
  %v83 = vpack.c.b16 %v81, %v80
  %vm86 = vcmask 261120
  %v88 = vsel %vm86, %v69, 0
  %90 = vmatprep.subr.bf16.mxu0 0
  %91 = vmatpush1.bf16.msra.mxu0 0
  %92 = vmatprep.subr.bf16.mxu0 0
  %93 = vmatpush1.bf16.msra.mxu0 0
  %94 = vmatprep.subr.bf16.mxu0 0
  %95 = vmatpush1.bf16.msra.mxu0 0
  %96 = vmatprep.subr.bf16.mxu0 0
  %97 = vmatpush1.bf16.msra.mxu0 0
  %98 = vmatprep.subr.bf16.mxu0 0
  %99 = vmatpush1.bf16.msra.mxu0 0
  %100 = vmatprep.subr.bf16.mxu0 0
  %101 = vmatpush1.bf16.msra.mxu0 0
  %102 = vmatprep.subr.bf16.mxu0 0
  %103 = vmatpush1.bf16.msra.mxu0 %v83
  %104 = vmatprep.subr.bf16.mxu0 0
  %105 = vmatpush1.bf16.msra.mxu0 %v82
  %106 = vmatprep.subr.bf16.mxu0 0
  %107 = vmatpush2.bf16.msra.mxu0 0
  %108 = vmatprep.subr.bf16.mxu0 0
  %109 = vmatpush2.bf16.msra.mxu0 0
  %110 = vmatprep.subr.bf16.mxu0 0
  %111 = vmatpush2.bf16.msra.mxu0 0
  %112 = vmatprep.subr.bf16.mxu0 0
  %113 = vmatpush2.bf16.msra.mxu0 0
  %114 = vmatprep.subr.bf16.mxu0 0
  %115 = vmatpush2.bf16.msra.mxu0 0
  %116 = vmatprep.subr.bf16.mxu0 0
  %117 = vmatpush2.bf16.msra.mxu0 0
  %118 = vmatprep.subr.bf16.mxu0 0
  %119 = vmatpush2.bf16.msra.mxu0 0
  %120 = vmatprep.subr.bf16.mxu0 0
  %121 = vmatpush2.bf16.msra.mxu0 0
  %122 = vmatprep.mubr.bf16.mxu0 0
  %123 = vmatmul.mubr.bf16.gmra.mxu0 %v88
  %v124 = vpop.f32.mrf.mxu0
  %v125 = vadd.f32 0.0, %v124
  %v126 = vpop.f32.mrf.mxu0
  %v127 = vpop.f32.mrf.mxu0
  %v128 = vpop.f32.mrf.mxu0
  %129 = vdwg.mxu0
  %vm130 = vcmask 58368
  %v131 = vsel %vm130, %v125, -inf
  %132 = vmax.xlane.f32.xlu0 %v131
  %v133 = vpop.xlane.xlu0 %132
  %v134 = vsub.f32 %v125, %v133
  %v135 = vmul.f32 %v134, 1.442695
  %v136 = vpow.pop %v135
  %v137 = vsel %vm130, %v136, 0.0
  %138 = vadd.xlane.f32.xlu0 %v137
  %v139 = vpop.xlane.xlu0 %138
  %v140 = vrcp.pop %v139
  %v141 = vmul.f32 %v136, %v140
  %v142 = vadd.f32 %v141, 1e-08
  %143 = vst.msk [vmem:[%s3] sm:$0x3] %vm130, %v142
  // Predicated region
  $region14: #{policy_network_forward.1} parent=0 // pred_check
    _
  $region15: #{policy_network_forward.1} parent=0 // pred_check_branch
    %145 = sbr.rel (0) target = $region17
  $region16: #{policy_network_forward.1} parent=0 // pred_region
    _
  $region17: #{policy_network_forward.1} parent=0 // pred_fallthru
    _
  // Predicated region
  $region18: #{policy_network_forward.1} parent=0 // pred_check
    _
  $region19: #{policy_network_forward.1} parent=0 // pred_check_branch
    %147 = sbr.rel (0) target = $region21
  $region20: #{policy_network_forward.1} parent=0 // pred_region
    _
  $region21: #{policy_network_forward.1} parent=0 // pred_fallthru
    _

</llo_original>
